<compile_context>
chip_gen: v7x
topology: tpu7x:2x2x1
jax: 0.10.0
libtpu: 0.0.40
codegen_flags: <defaults>
</compile_context>

<pallas_src>
import jax
import jax.numpy as jnp
from jax.experimental import pallas as pl
from jax.experimental.pallas import tpu as pltpu


def _bahdanau_kernel(q_ref, pk_ref, v_ref, mask_ref, wq_ref, we_ref,
                     ctx_ref, alpha_ref):
    # q_ref: (1, Q), pk_ref: (S, H), v_ref: (S, V), mask_ref: (1, S)
    # wq_ref: (H, Q) [PyTorch out,in], we_ref: (1, H) [PyTorch out,in]
    # 1) query projection: query @ W_q.T -> (1, H)  (contract "in" dims in-kernel)
    q_proj = jax.lax.dot_general(
        q_ref[...], wq_ref[...],
        dimension_numbers=(((1,), (1,)), ((), ())),
        preferred_element_type=jnp.float32)
    # 2) energies: tanh(q_proj + proj_key) -> (S, H)   (broadcast over S)
    e = jnp.tanh(q_proj + pk_ref[...].astype(jnp.float32))
    # 3) scores: W_e contracted against hidden dim -> (1, S), already "transposed"
    scores = jax.lax.dot_general(
        we_ref[...], e,
        dimension_numbers=(((1,), (1,)), ((), ())),
        preferred_element_type=jnp.float32)
    # 4) mask + softmax over S
    scores = jnp.where(mask_ref[...] == 0, -jnp.inf, scores)
    m = jnp.max(scores, axis=-1, keepdims=True)
    p = jnp.exp(scores - m)
    denom = jnp.sum(p, axis=-1, keepdims=True)
    alphas = p / denom
    alpha_ref[...] = alphas.astype(alpha_ref.dtype)
    # 5) context = alphas @ value -> (1, V)
    ctx = jnp.dot(alphas, v_ref[...], preferred_element_type=jnp.float32)
    ctx_ref[...] = ctx.astype(ctx_ref.dtype)


def bahdanau_attention(query, proj_key, value, mask, w_query, w_energy):
    """query: (B,1,Q)  proj_key: (B,S,H)  value: (B,S,V)  mask: (B,1,S)
       w_query: (H,Q)  w_energy: (1,H)  ->  (context (B,1,V), alphas (B,1,S))"""
    B, _, Q = query.shape
    _, S, H = proj_key.shape
    V = value.shape[-1]
    mask = mask.astype(jnp.int32)

    flops = B * (2 * Q * H + 2 * S * H + 2 * S * V + 4 * S)
    transcendentals = B * S * (H + 1)  # tanh + exp
    bytes_accessed = 4 * (query.size + proj_key.size + value.size + mask.size
                          + w_query.size + w_energy.size + B * V + B * S)

    context, alphas = pl.pallas_call(
        _bahdanau_kernel,
        out_shape=(jax.ShapeDtypeStruct((B, 1, V), value.dtype),
                   jax.ShapeDtypeStruct((B, 1, S), jnp.float32)),
        grid_spec=pltpu.PrefetchScalarGridSpec(
            num_scalar_prefetch=0,
            grid=(B,),
            in_specs=[
                pl.BlockSpec((None, 1, Q), lambda b: (b, 0, 0)),   # query
                pl.BlockSpec((None, S, H), lambda b: (b, 0, 0)),   # proj_key
                pl.BlockSpec((None, S, V), lambda b: (b, 0, 0)),   # value
                pl.BlockSpec((None, 1, S), lambda b: (b, 0, 0)),   # mask
                pl.BlockSpec((H, Q), lambda b: (0, 0)),            # W_query (resident)
                pl.BlockSpec((1, H), lambda b: (0, 0)),            # W_energy (resident)
            ],
            out_specs=(
                pl.BlockSpec((None, 1, V), lambda b: (b, 0, 0)),   # context
                pl.BlockSpec((None, 1, S), lambda b: (b, 0, 0)),   # alphas
            ),
        ),
        compiler_params=pltpu.CompilerParams(
            dimension_semantics=("parallel",)),
        cost_estimate=pl.CostEstimate(
            flops=flops,
            transcendentals=transcendentals,
            bytes_accessed=bytes_accessed),
    )(query, proj_key, value, mask, w_query, w_energy)
    return context, alphas


if __name__ == "__main__":
    # shapes implied by the module: hidden=32, query_size=hidden, value dim = 2*hidden
    B, S, H = 2, 8, 32
    Q = H          # query_size
    V = 2 * H      # value / encoder-output width

    key = jax.random.PRNGKey(0)
    kq, kk, kv, km, kwq, kwe = jax.random.split(key, 6)

    query = jax.random.normal(kq, (B, 1, Q), dtype=jnp.float32)
    proj_key = jax.random.normal(kk, (B, S, H), dtype=jnp.float32)
    value = jax.random.normal(kv, (B, S, V), dtype=jnp.float32)
    mask = (jax.random.uniform(km, (B, 1, S)) > 0.3).astype(jnp.int32)
    mask = mask.at[:, :, 0].set(1)  # guarantee at least one valid position per row

    # nn.Linear default init: U(-1/sqrt(in_features), 1/sqrt(in_features))
    bq = 1.0 / (Q ** 0.5)
    w_query = jax.random.uniform(kwq, (H, Q), dtype=jnp.float32, minval=-bq, maxval=bq)
    be = 1.0 / (H ** 0.5)
    w_energy = jax.random.uniform(kwe, (1, H), dtype=jnp.float32, minval=-be, maxval=be)

    context, alphas = bahdanau_attention(query, proj_key, value, mask, w_query, w_energy)
    context, alphas = jax.block_until_ready((context, alphas))

    # pure-JAX reference (high precision)
    hi = jax.lax.Precision.HIGHEST
    q_proj = jnp.einsum("boq,hq->boh", query, w_query, precision=hi)       # (B,1,H)
    e = jnp.tanh(q_proj + proj_key)                                        # (B,S,H)
    scores = jnp.einsum("bsh,oh->bos", e, w_energy, precision=hi)          # (B,1,S)
    scores = jnp.where(mask == 0, -jnp.inf, scores)
    alphas_ref = jax.nn.softmax(scores, axis=-1)
    context_ref = jnp.einsum("bos,bsv->bov", alphas_ref, value, precision=hi)

    assert context.shape == (B, 1, V)
    assert alphas.shape == (B, 1, S)
    assert jnp.allclose(alphas, alphas_ref, atol=1e-3, rtol=1e-3)
    assert jnp.allclose(context, context_ref, atol=1e-3, rtol=1e-3)

    print("KERNEL_OK")
</pallas_src>

<mosaic_0001>
module attributes {stable_mosaic.version = 11 : i64} {
  func.func @_bahdanau_kernel(%arg0: i32, %arg1: memref<1x1x32xf32, #tpu.memory_space<vmem>>, %arg2: memref<1x8x32xf32, #tpu.memory_space<vmem>>, %arg3: memref<1x8x64xf32, #tpu.memory_space<vmem>>, %arg4: memref<1x1x8xi32, #tpu.memory_space<vmem>>, %arg5: memref<32x32xf32, #tpu.memory_space<vmem>>, %arg6: memref<1x32xf32, #tpu.memory_space<vmem>>, %arg7: memref<1x1x64xf32, #tpu.memory_space<vmem>>, %arg8: memref<1x1x8xf32, #tpu.memory_space<vmem>>) attributes {dimension_semantics = [#tpu.dimension_semantics<parallel>], iteration_bounds = array<i64: 2>, scalar_prefetch = 0 : i64, scratch_operands = 0 : i64, tpu.core_type = #tpu.core_type<tc>, window_params = [{transform_indices = @transform_0, window_bounds = array<i64: 1, 1, 32>}, {transform_indices = @transform_1, window_bounds = array<i64: 1, 8, 32>}, {transform_indices = @transform_2, window_bounds = array<i64: 1, 8, 64>}, {transform_indices = @transform_3, window_bounds = array<i64: 1, 1, 8>}, {pipeline_mode = #tpu.pipeline_mode<synchronous>, transform_indices = @transform_4, window_bounds = array<i64: 32, 32>}, {pipeline_mode = #tpu.pipeline_mode<synchronous>, transform_indices = @transform_5, window_bounds = array<i64: 1, 32>}, {transform_indices = @transform_6, window_bounds = array<i64: 1, 1, 64>}, {transform_indices = @transform_7, window_bounds = array<i64: 1, 1, 8>}]} {
    %c0 = arith.constant 0 : index
    %c0_0 = arith.constant 0 : index
    %c0_1 = arith.constant 0 : index
    %0 = vector.load %arg1[%c0, %c0_0, %c0_1] : memref<1x1x32xf32, #tpu.memory_space<vmem>>, vector<1x1x32xf32>
    %1 = vector.shape_cast %0 : vector<1x1x32xf32> to vector<1x32xf32>
    %c0_2 = arith.constant 0 : index
    %c0_3 = arith.constant 0 : index
    %2 = vector.load %arg5[%c0_2, %c0_3] : memref<32x32xf32, #tpu.memory_space<vmem>>, vector<32x32xf32>
    %cst = arith.constant dense<0.000000e+00> : vector<1x32xf32>
    %3 = tpu.matmul %1, %2, %cst {dimension_numbers = #tpu.dot_dimension_numbers<[1], [1], [0], [0], [0, 0, 1, 0], [], []>} : vector<1x32xf32>, vector<32x32xf32>, vector<1x32xf32> -> vector<1x32xf32>
    %c0_4 = arith.constant 0 : index
    %c0_5 = arith.constant 0 : index
    %c0_6 = arith.constant 0 : index
    %4 = vector.load %arg2[%c0_4, %c0_5, %c0_6] : memref<1x8x32xf32, #tpu.memory_space<vmem>>, vector<1x8x32xf32>
    %5 = vector.shape_cast %4 : vector<1x8x32xf32> to vector<8x32xf32>
    %6 = vector.broadcast %3 : vector<1x32xf32> to vector<8x32xf32>
    %7 = arith.addf %6, %5 : vector<8x32xf32>
    %8 = math.tanh %7 : vector<8x32xf32>
    %c0_7 = arith.constant 0 : index
    %c0_8 = arith.constant 0 : index
    %9 = vector.load %arg6[%c0_7, %c0_8] : memref<1x32xf32, #tpu.memory_space<vmem>>, vector<1x32xf32>
    %cst_9 = arith.constant dense<0.000000e+00> : vector<1x8xf32>
    %10 = tpu.matmul %9, %8, %cst_9 {dimension_numbers = #tpu.dot_dimension_numbers<[1], [1], [0], [0], [0, 0, 1, 0], [], []>} : vector<1x32xf32>, vector<8x32xf32>, vector<1x8xf32> -> vector<1x8xf32>
    %c0_10 = arith.constant 0 : index
    %c0_11 = arith.constant 0 : index
    %c0_12 = arith.constant 0 : index
    %11 = vector.load %arg4[%c0_10, %c0_11, %c0_12] : memref<1x1x8xi32, #tpu.memory_space<vmem>>, vector<1x1x8xi32>
    %12 = vector.shape_cast %11 : vector<1x1x8xi32> to vector<1x8xi32>
    %c0_i32 = arith.constant 0 : i32
    %13 = vector.broadcast %c0_i32 : i32 to vector<1x8xi32>
    %14 = arith.cmpi eq, %12, %13 : vector<1x8xi32>
    %cst_13 = arith.constant 0xFF800000 : f32
    %15 = vector.broadcast %cst_13 : f32 to vector<1x8xf32>
    %16 = arith.select %14, %15, %10 : vector<1x8xi1>, vector<1x8xf32>
    %cst_14 = arith.constant dense<0xFF800000> : vector<1xf32>
    %17 = vector.multi_reduction <maximumf>, %16, %cst_14 [1] : vector<1x8xf32> to vector<1xf32>
    %18 = vector.shape_cast %17 : vector<1xf32> to vector<1x1xf32>
    %19 = vector.broadcast %18 : vector<1x1xf32> to vector<1x8xf32>
    %20 = arith.subf %16, %19 : vector<1x8xf32>
    %21 = math.exp %20 : vector<1x8xf32>
    %cst_15 = arith.constant dense<0.000000e+00> : vector<1xf32>
    %22 = vector.multi_reduction <add>, %21, %cst_15 [1] : vector<1x8xf32> to vector<1xf32>
    %23 = vector.shape_cast %22 : vector<1xf32> to vector<1x1xf32>
    %24 = vector.broadcast %23 : vector<1x1xf32> to vector<1x8xf32>
    %25 = arith.divf %21, %24 : vector<1x8xf32>
    %c0_16 = arith.constant 0 : index
    %c0_17 = arith.constant 0 : index
    %c0_18 = arith.constant 0 : index
    %26 = vector.load %arg8[%c0_16, %c0_17, %c0_18] : memref<1x1x8xf32, #tpu.memory_space<vmem>>, vector<1x1x8xf32>
    %27 = vector.shape_cast %26 : vector<1x1x8xf32> to vector<1x8xf32>
    %28 = vector.shape_cast %25 : vector<1x8xf32> to vector<1x1x8xf32>
    tpu.vector_store %arg8[%c0_16, %c0_17, %c0_18], %28 {strides = array<i32>} : memref<1x1x8xf32, #tpu.memory_space<vmem>>, vector<1x1x8xf32>,
    %c0_19 = arith.constant 0 : index
    %c0_20 = arith.constant 0 : index
    %c0_21 = arith.constant 0 : index
    %29 = vector.load %arg3[%c0_19, %c0_20, %c0_21] : memref<1x8x64xf32, #tpu.memory_space<vmem>>, vector<1x8x64xf32>
    %30 = vector.shape_cast %29 : vector<1x8x64xf32> to vector<8x64xf32>
    %cst_22 = arith.constant dense<0.000000e+00> : vector<1x64xf32>
    %31 = tpu.matmul %25, %30, %cst_22 {dimension_numbers = #tpu.dot_dimension_numbers<[1], [0], [0], [1], [0, 0, 1, 1], [], []>} : vector<1x8xf32>, vector<8x64xf32>, vector<1x64xf32> -> vector<1x64xf32>
    %c0_23 = arith.constant 0 : index
    %c0_24 = arith.constant 0 : index
    %c0_25 = arith.constant 0 : index
    %32 = vector.load %arg7[%c0_23, %c0_24, %c0_25] : memref<1x1x64xf32, #tpu.memory_space<vmem>>, vector<1x1x64xf32>
    %33 = vector.shape_cast %32 : vector<1x1x64xf32> to vector<1x64xf32>
    %34 = vector.shape_cast %31 : vector<1x64xf32> to vector<1x1x64xf32>
    tpu.vector_store %arg7[%c0_23, %c0_24, %c0_25], %34 {strides = array<i32>} : memref<1x1x64xf32, #tpu.memory_space<vmem>>, vector<1x1x64xf32>,
    return
  }
  func.func @transform_0(%arg0: i32) -> (i32, i32, i32) {
    %c0_i32 = arith.constant 0 : i32
    %c0_i32_0 = arith.constant 0 : i32
    %c0_i32_1 = arith.constant 0 : i32
    return %arg0, %c0_i32, %c0_i32_0 : i32, i32, i32
  }
  func.func @transform_1(%arg0: i32) -> (i32, i32, i32) {
    %c0_i32 = arith.constant 0 : i32
    %c0_i32_0 = arith.constant 0 : i32
    %c0_i32_1 = arith.constant 0 : i32
    return %arg0, %c0_i32, %c0_i32_0 : i32, i32, i32
  }
  func.func @transform_2(%arg0: i32) -> (i32, i32, i32) {
    %c0_i32 = arith.constant 0 : i32
    %c0_i32_0 = arith.constant 0 : i32
    %c0_i32_1 = arith.constant 0 : i32
    return %arg0, %c0_i32, %c0_i32_0 : i32, i32, i32
  }
  func.func @transform_3(%arg0: i32) -> (i32, i32, i32) {
    %c0_i32 = arith.constant 0 : i32
    %c0_i32_0 = arith.constant 0 : i32
    %c0_i32_1 = arith.constant 0 : i32
    return %arg0, %c0_i32, %c0_i32_0 : i32, i32, i32
  }
  func.func @transform_4(%arg0: i32) -> (i32, i32) {
    %c0_i32 = arith.constant 0 : i32
    %c0_i32_0 = arith.constant 0 : i32
    %c0_i32_1 = arith.constant 0 : i32
    return %c0_i32, %c0_i32_0 : i32, i32
  }
  func.func @transform_5(%arg0: i32) -> (i32, i32) {
    %c0_i32 = arith.constant 0 : i32
    %c0_i32_0 = arith.constant 0 : i32
    %c0_i32_1 = arith.constant 0 : i32
    return %c0_i32, %c0_i32_0 : i32, i32
  }
  func.func @transform_6(%arg0: i32) -> (i32, i32, i32) {
    %c0_i32 = arith.constant 0 : i32
    %c0_i32_0 = arith.constant 0 : i32
    %c0_i32_1 = arith.constant 0 : i32
    return %arg0, %c0_i32, %c0_i32_0 : i32, i32, i32
  }
  func.func @transform_7(%arg0: i32) -> (i32, i32, i32) {
    %c0_i32 = arith.constant 0 : i32
    %c0_i32_0 = arith.constant 0 : i32
    %c0_i32_1 = arith.constant 0 : i32
    return %arg0, %c0_i32, %c0_i32_0 : i32, i32, i32
  }
}

</mosaic_0001>

<llo_original>
// kernel: tpu_custom_call.1
$region0: #{tpu_custom_call.1}
  #allocation0 [shape = 'u32[]', space=smem, size = 0x4, offset = 0x4, fixed_abs, tag = 'smem constant byte address 0x4 - core index']
  #allocation1 [shape = 'u32[144,128]{1,0:T(1,128)}', space=vmem, size = 0x12000, scoped, tag = 'internal scratch']
  %s0 = inlined_call_operand.hbm [shape: f32[2,1,32], index: 0, kind: input, shape index: {}]
  %s1 = inlined_call_operand.hbm [shape: f32[2,8,32], index: 1, kind: input, shape index: {}]
  %s2 = inlined_call_operand.hbm [shape: f32[2,8,64], index: 2, kind: input, shape index: {}]
  %s3 = inlined_call_operand.vmem [shape: s32[2,1,8], index: 3, kind: input, shape index: {}]
  %s4 = inlined_call_operand.hbm [shape: f32[32,32], index: 4, kind: input, shape index: {}]
  %s5 = inlined_call_operand.vmem [shape: f32[1,32], index: 5, kind: input, shape index: {}]
  %s6 = inlined_call_operand.hbm [shape: f32[2,1,64], index: 6, kind: output, shape index: {0}]
  %s7 = inlined_call_operand.hbm [shape: f32[2,1,8], index: 7, kind: output, shape index: {1}]
  %8 = xla_tuple %s6, %s7
  %s9 = sld [smem:[#allocation0]]
  $region81: #{tpu_custom_call.1} parent=0
    _
  %s11 = ssub.s32 1, %s9
  %s12 = scalar_select 0, %s11, %s9
  $region1: #{tpu_custom_call.1} parent=0
    #allocation2 [shape = 'u8[1024]{0}', space=vmem, size = 0x400, scoped, tag = 'input window, operand 0']
    #allocation3 [shape = 's32[2]{0}', space=sflag, size = 0x8, scoped, tag = 'scoped memory for tpu_custom_call.1']
    #allocation4 [shape = 's32[2]{0}', space=sflag, size = 0x8, scoped, tag = 'scoped memory for tpu_custom_call.1']
    #allocation5 [shape = 'u8[8192]{0}', space=vmem, size = 0x2000, scoped, tag = 'input window, operand 1']
    #allocation6 [shape = 's32[2]{0}', space=sflag, size = 0x8, scoped, tag = 'scoped memory for tpu_custom_call.1']
    #allocation7 [shape = 'u8[8192]{0}', space=vmem, size = 0x2000, scoped, tag = 'input window, operand 2']
    #allocation8 [shape = 'u8[16384]{0}', space=vmem, size = 0x4000, scoped, tag = 'input window, operand 4, single buffered']
    #allocation9 [shape = 's32[1]{0}', space=sflag, size = 0x4, scoped, tag = 'scoped memory for tpu_custom_call.1']
    #allocation10 [shape = 'u8[1024]{0}', space=vmem, size = 0x400, scoped, tag = 'output window, operand 0']
    #allocation11 [shape = 'u8[1024]{0}', space=vmem, size = 0x400, scoped, tag = 'output window, operand 1']
    #allocation12 [shape = 's32[2]{0}', space=sflag, size = 0x8, scoped, tag = 'scoped memory for tpu_custom_call.1']
    %13 = vsyncpa [#allocation3], 0
    %s14 = scalar_lea.sflag [#allocation3], 1
    %15 = vsyncpa %s14, 0
    %16 = vsyncpa [#allocation6], 0
    %s17 = scalar_lea.sflag [#allocation6], 1
    %18 = vsyncpa %s17, 0
    %19 = vsyncpa [#allocation9], 0
    %20 = vsyncpa [#allocation4], 0
    %s21 = scalar_lea.sflag [#allocation4], 1
    %22 = vsyncpa %s21, 0
    %23 = vsyncpa [#allocation12], 0
    %s24 = scalar_lea.sflag [#allocation12], 1
    %25 = vsyncpa %s24, 0
    loop: start=0, step=1, limit=4
    $region2: #{tpu_custom_call.1} parent=1 // loop_pre_header
      _
    $region3: #{tpu_custom_call.1} parent=1 // loop_header
      %s27 = sphi 0, %s31
      %p28 = scmp.ge.s32.totalorder %s27, 4
      %s37 = sphi 0, %s39
      %s40 = sphi 0, %s37
      %s41 = sphi 0, %s40
      %s57 = sphi 0, %s41
      %s63 = sphi 0, %s65
      %s66 = sphi 0, %s63
      %s67 = sphi 0, %s66
      %s83 = sphi 0, %s67
      %s89 = sphi 0, %s91
      %s92 = sphi 0, %s89
      %s93 = sphi 0, %s92
      %s109 = sphi 0, %s93
      %s115 = sphi 0, %s117
      %s118 = sphi 0, %s115
      %s119 = sphi 0, %s118
      %s135 = sphi 0, %s119
      %s139 = sphi 0, %s139
      %s141 = sphi 0, %s139
      %s142 = sphi 0, %s141
      %s156 = sphi 0, %s142
      %s160 = sphi 0, %s160
      %s162 = sphi 0, %s160
      %s163 = sphi 0, %s162
      %s177 = sphi 0, %s163
      %s183 = sphi 0, %s185
      %s186 = sphi 0, %s183
      %s187 = sphi 0, %s186
      %s203 = sphi 0, %s187
      %s209 = sphi 0, %s211
      %s212 = sphi 0, %s209
      %s213 = sphi 0, %s212
      %s229 = sphi 0, %s213
    $region4: #{tpu_custom_call.1} parent=1 // loop_header_branch
      %30 = sbr.rel (%p28) target = $region8
    $region5: #{tpu_custom_call.1} parent=1 // loop_body
      %s32 = ssub.s32 %s27, 1
      %s33 = ssub.s32 %s27, 2
      %s34 = sadd.s32 %s27, 1
      %s35 = ssub.s32 %s27, %s34
      %p36 = scmp.eq.s32.totalorder %s35, 0
      %s38 = sadd.s32 %s37, 1
      %s39 = scalar_select %p36, %s37, %s38
      %p42 = pneg %p36
      %p43 = scmp.eq.s32.totalorder %s27, 1
      %p44 = por %p42, %p43
      %p45 = scmp.ne.s32.totalorder %s37, %s40
      %p46 = scmp.eq.s32.totalorder %s27, 0
      %p47 = por %p45, %p46
      %p48 = scmp.ne.s32.totalorder %s37, %s40
      %p49 = scmp.eq.s32.totalorder %s32, 1
      %p50 = por %p48, %p49
      %p51 = scmp.ne.s32.totalorder %s40, %s41
      %p52 = scmp.eq.s32.totalorder %s32, 0
      %p53 = por %p51, %p52
      %p54 = scmp.ne.s32.totalorder %s40, %s41
      %p55 = scmp.eq.s32.totalorder %s33, 1
      %p56 = por %p54, %p55
      %p58 = scmp.ne.s32.totalorder %s41, %s57
      %p59 = scmp.eq.s32.totalorder %s33, 0
      %p60 = por %p58, %p59
      %s61 = ssub.s32 %s27, %s34
      %p62 = scmp.eq.s32.totalorder %s61, 0
      %s64 = sadd.s32 %s63, 1
      %s65 = scalar_select %p62, %s63, %s64
      %p68 = pneg %p62
      %p69 = scmp.eq.s32.totalorder %s27, 1
      %p70 = por %p68, %p69
      %p71 = scmp.ne.s32.totalorder %s63, %s66
      %p72 = scmp.eq.s32.totalorder %s27, 0
      %p73 = por %p71, %p72
      %p74 = scmp.ne.s32.totalorder %s63, %s66
      %p75 = scmp.eq.s32.totalorder %s32, 1
      %p76 = por %p74, %p75
      %p77 = scmp.ne.s32.totalorder %s66, %s67
      %p78 = scmp.eq.s32.totalorder %s32, 0
      %p79 = por %p77, %p78
      %p80 = scmp.ne.s32.totalorder %s66, %s67
      %p81 = scmp.eq.s32.totalorder %s33, 1
      %p82 = por %p80, %p81
      %p84 = scmp.ne.s32.totalorder %s67, %s83
      %p85 = scmp.eq.s32.totalorder %s33, 0
      %p86 = por %p84, %p85
      %s87 = ssub.s32 %s27, %s34
      %p88 = scmp.eq.s32.totalorder %s87, 0
      %s90 = sadd.s32 %s89, 1
      %s91 = scalar_select %p88, %s89, %s90
      %p94 = pneg %p88
      %p95 = scmp.eq.s32.totalorder %s27, 1
      %p96 = por %p94, %p95
      %p97 = scmp.ne.s32.totalorder %s89, %s92
      %p98 = scmp.eq.s32.totalorder %s27, 0
      %p99 = por %p97, %p98
      %p100 = scmp.ne.s32.totalorder %s89, %s92
      %p101 = scmp.eq.s32.totalorder %s32, 1
      %p102 = por %p100, %p101
      %p103 = scmp.ne.s32.totalorder %s92, %s93
      %p104 = scmp.eq.s32.totalorder %s32, 0
      %p105 = por %p103, %p104
      %p106 = scmp.ne.s32.totalorder %s92, %s93
      %p107 = scmp.eq.s32.totalorder %s33, 1
      %p108 = por %p106, %p107
      %p110 = scmp.ne.s32.totalorder %s93, %s109
      %p111 = scmp.eq.s32.totalorder %s33, 0
      %p112 = por %p110, %p111
      %s113 = ssub.s32 %s27, %s34
      %p114 = scmp.eq.s32.totalorder %s113, 0
      %s116 = sadd.s32 %s115, 1
      %s117 = scalar_select %p114, %s115, %s116
      %p120 = pneg %p114
      %p121 = scmp.eq.s32.totalorder %s27, 1
      %p122 = por %p120, %p121
      %p123 = scmp.ne.s32.totalorder %s115, %s118
      %p124 = scmp.eq.s32.totalorder %s27, 0
      %p125 = por %p123, %p124
      %p126 = scmp.ne.s32.totalorder %s115, %s118
      %p127 = scmp.eq.s32.totalorder %s32, 1
      %p128 = por %p126, %p127
      %p129 = scmp.ne.s32.totalorder %s118, %s119
      %p130 = scmp.eq.s32.totalorder %s32, 0
      %p131 = por %p129, %p130
      %p132 = scmp.ne.s32.totalorder %s118, %s119
      %p133 = scmp.eq.s32.totalorder %s33, 1
      %p134 = por %p132, %p133
      %p136 = scmp.ne.s32.totalorder %s119, %s135
      %p137 = scmp.eq.s32.totalorder %s33, 0
      %p138 = por %p136, %p137
      %s140 = sadd.s32 %s139, 1
      %p143 = scmp.eq.s32.totalorder %s27, 1
      %p144 = scmp.ne.s32.totalorder %s139, %s141
      %p145 = scmp.eq.s32.totalorder %s27, 0
      %p146 = por %p144, %p145
      %p147 = scmp.ne.s32.totalorder %s139, %s141
      %p148 = scmp.eq.s32.totalorder %s32, 1
      %p149 = por %p147, %p148
      %p150 = scmp.ne.s32.totalorder %s141, %s142
      %p151 = scmp.eq.s32.totalorder %s32, 0
      %p152 = por %p150, %p151
      %p153 = scmp.ne.s32.totalorder %s141, %s142
      %p154 = scmp.eq.s32.totalorder %s33, 1
      %p155 = por %p153, %p154
      %p157 = scmp.ne.s32.totalorder %s142, %s156
      %p158 = scmp.eq.s32.totalorder %s33, 0
      %p159 = por %p157, %p158
      %s161 = sadd.s32 %s160, 1
      %p164 = scmp.eq.s32.totalorder %s27, 1
      %p165 = scmp.ne.s32.totalorder %s160, %s162
      %p166 = scmp.eq.s32.totalorder %s27, 0
      %p167 = por %p165, %p166
      %p168 = scmp.ne.s32.totalorder %s160, %s162
      %p169 = scmp.eq.s32.totalorder %s32, 1
      %p170 = por %p168, %p169
      %p171 = scmp.ne.s32.totalorder %s162, %s163
      %p172 = scmp.eq.s32.totalorder %s32, 0
      %p173 = por %p171, %p172
      %p174 = scmp.ne.s32.totalorder %s162, %s163
      %p175 = scmp.eq.s32.totalorder %s33, 1
      %p176 = por %p174, %p175
      %p178 = scmp.ne.s32.totalorder %s163, %s177
      %p179 = scmp.eq.s32.totalorder %s33, 0
      %p180 = por %p178, %p179
      %s181 = ssub.s32 %s27, %s34
      %p182 = scmp.eq.s32.totalorder %s181, 0
      %s184 = sadd.s32 %s183, 1
      %s185 = scalar_select %p182, %s183, %s184
      %p188 = pneg %p182
      %p189 = scmp.eq.s32.totalorder %s27, 1
      %p190 = por %p188, %p189
      %p191 = scmp.ne.s32.totalorder %s183, %s186
      %p192 = scmp.eq.s32.totalorder %s27, 0
      %p193 = por %p191, %p192
      %p194 = scmp.ne.s32.totalorder %s183, %s186
      %p195 = scmp.eq.s32.totalorder %s32, 1
      %p196 = por %p194, %p195
      %p197 = scmp.ne.s32.totalorder %s186, %s187
      %p198 = scmp.eq.s32.totalorder %s32, 0
      %p199 = por %p197, %p198
      %p200 = scmp.ne.s32.totalorder %s186, %s187
      %p201 = scmp.eq.s32.totalorder %s33, 1
      %p202 = por %p200, %p201
      %p204 = scmp.ne.s32.totalorder %s187, %s203
      %p205 = scmp.eq.s32.totalorder %s33, 0
      %p206 = por %p204, %p205
      %s207 = ssub.s32 %s27, %s34
      %p208 = scmp.eq.s32.totalorder %s207, 0
      %s210 = sadd.s32 %s209, 1
      %s211 = scalar_select %p208, %s209, %s210
      %p214 = pneg %p208
      %p215 = scmp.eq.s32.totalorder %s27, 1
      %p216 = por %p214, %p215
      %p217 = scmp.ne.s32.totalorder %s209, %s212
      %p218 = scmp.eq.s32.totalorder %s27, 0
      %p219 = por %p217, %p218
      %p220 = scmp.ne.s32.totalorder %s209, %s212
      %p221 = scmp.eq.s32.totalorder %s32, 1
      %p222 = por %p220, %p221
      %p223 = scmp.ne.s32.totalorder %s212, %s213
      %p224 = scmp.eq.s32.totalorder %s32, 0
      %p225 = por %p223, %p224
      %p226 = scmp.ne.s32.totalorder %s212, %s213
      %p227 = scmp.eq.s32.totalorder %s33, 1
      %p228 = por %p226, %p227
      %p230 = scmp.ne.s32.totalorder %s213, %s229
      %p231 = scmp.eq.s32.totalorder %s33, 0
      %p232 = por %p230, %p231
      %p233 = scmp.le.s32.totalorder 1, %s27
      %p234 = scmp.lt.s32.totalorder %s27, 3
      %p235 = pnand %p233, %p234
      %p236 = pneg %p235
      // Predicated region
      $region9: #{tpu_custom_call.1} parent=5 // pred_check
        _
      $region10: #{tpu_custom_call.1} parent=5 // pred_check_branch
        %238 = sbr.rel (%p235) target = $region12
      $region11: #{tpu_custom_call.1} parent=5 // pred_region
        %s239 = ssub.s32 %s27, 1
        // Predicated region
        $region13: #{tpu_custom_call.1} parent=11 // pred_check
          %p240 = pneg %p152
        $region14: #{tpu_custom_call.1} parent=11 // pred_check_branch
          %242 = sbr.rel (%p240) target = $region16
        $region15: #{tpu_custom_call.1} parent=11 // pred_region
          %s244 = ssub.s32 512, 512
          %245 = vsyncadd [#allocation9], %s244
          %s246 = sshll.u32 [#allocation8], 4
          %s247 = int_to_ptr.vmem [resolvable:$true] %s246
          %252 = dma.hbm_to_vmem [thread:$0]  %s4, 512, %s247, [#allocation9], 128, 128, 8
        $region16: #{tpu_custom_call.1} parent=11 // pred_fallthru
          _
        // Predicated region
        $region17: #{tpu_custom_call.1} parent=11 // pred_check
          %p253 = pneg %p173
        $region18: #{tpu_custom_call.1} parent=11 // pred_check_branch
          %255 = sbr.rel (%p253) target = $region20
        $region19: #{tpu_custom_call.1} parent=11 // pred_region
          _
        $region20: #{tpu_custom_call.1} parent=11 // pred_fallthru
          _
      $region12: #{tpu_custom_call.1} parent=5 // pred_fallthru
        _
      %p256 = scmp.lt.s32.totalorder %s27, 2
      // Predicated region
      $region21: #{tpu_custom_call.1} parent=5 // pred_check
        %p257 = pneg %p256
      $region22: #{tpu_custom_call.1} parent=5 // pred_check_branch
        %259 = sbr.rel (%p257) target = $region24
      $region23: #{tpu_custom_call.1} parent=5 // pred_region
        // Predicated region
        $region25: #{tpu_custom_call.1} parent=23 // pred_check
          %p260 = pneg %p47
        $region26: #{tpu_custom_call.1} parent=23 // pred_check_branch
          %262 = sbr.rel (%p260) target = $region28
        $region27: #{tpu_custom_call.1} parent=23 // pred_region
          %s263 = sand.u32 %s37, 1
          %s264 = scalar_lea.sflag [#allocation3], %s263
          %s265 = sand.u32 %s37, 1
          %s266 = scalar_lea.vmem [#allocation2], %s265
          %s268 = ssub.s32 16, 16
          %269 = vsyncadd %s264, %s268
          %s270 = smul.addr %s27, 16
          %s271 = scalar_lea.hbm %s0, %s270
          %s273 = sshll.u32 %s266, 4
          %s274 = int_to_ptr.vmem [resolvable:$true] %s273
          %276 = dma.hbm_to_vmem [thread:$0]  %s271, 16, %s274, %s264
        $region28: #{tpu_custom_call.1} parent=23 // pred_fallthru
          _
        // Predicated region
        $region29: #{tpu_custom_call.1} parent=23 // pred_check
          %p277 = pneg %p73
        $region30: #{tpu_custom_call.1} parent=23 // pred_check_branch
          %279 = sbr.rel (%p277) target = $region32
        $region31: #{tpu_custom_call.1} parent=23 // pred_region
          %s280 = sand.u32 %s27, 1
          %s281 = scalar_lea.sflag [#allocation6], %s280
          %s282 = sand.u32 %s63, 1
          %s283 = smul.addr %s282, 8
          %s284 = scalar_lea.vmem [#allocation5], %s283
          %s286 = ssub.s32 128, 128
          %287 = vsyncadd %s281, %s286
          %s288 = smul.addr %s27, 128
          %s289 = scalar_lea.hbm %s1, %s288
          %s291 = sshll.u32 %s284, 4
          %s292 = int_to_ptr.vmem [resolvable:$true] %s291
          %294 = dma.hbm_to_vmem [thread:$0]  %s289, 128, %s292, %s281
        $region32: #{tpu_custom_call.1} parent=23 // pred_fallthru
          _
        // Predicated region
        $region33: #{tpu_custom_call.1} parent=23 // pred_check
          %p295 = pneg %p99
        $region34: #{tpu_custom_call.1} parent=23 // pred_check_branch
          %297 = sbr.rel (%p295) target = $region36
        $region35: #{tpu_custom_call.1} parent=23 // pred_region
          %s298 = sand.u32 %s27, 1
          %s299 = scalar_lea.sflag [#allocation6], %s298
          %s300 = sand.u32 %s89, 1
          %s301 = smul.addr %s300, 8
          %s302 = scalar_lea.vmem [#allocation7], %s301
          %s304 = ssub.s32 128, 128
          %305 = vsyncadd %s299, %s304
          %s306 = smul.addr %s27, 128
          %s307 = scalar_lea.hbm %s2, %s306
          %s309 = sshll.u32 %s302, 4
          %s310 = int_to_ptr.vmem [resolvable:$true] %s309
          %312 = dma.hbm_to_vmem [thread:$0]  %s307, 128, %s310, %s299
        $region36: #{tpu_custom_call.1} parent=23 // pred_fallthru
          _
        // Predicated region
        $region37: #{tpu_custom_call.1} parent=23 // pred_check
          %p313 = pneg %p125
        $region38: #{tpu_custom_call.1} parent=23 // pred_check_branch
          %315 = sbr.rel (%p313) target = $region40
        $region39: #{tpu_custom_call.1} parent=23 // pred_region
          %p316 = scmp.lt.s32.totalorder %s27, 1
          %s317 = scalar_select %p316, %s27, 1
          %s318 = scalar_lea.vmem %s3, %s317
        $region40: #{tpu_custom_call.1} parent=23 // pred_fallthru
          _
      $region24: #{tpu_custom_call.1} parent=5 // pred_fallthru
        _
      %p319 = scmp.le.s32.totalorder 1, %s27
      %p320 = scmp.lt.s32.totalorder %s27, 3
      %p321 = pnand %p319, %p320
      %p322 = pneg %p321
      // Predicated region
      $region41: #{tpu_custom_call.1} parent=5 // pred_check
        _
      $region42: #{tpu_custom_call.1} parent=5 // pred_check_branch
        %324 = sbr.rel (%p321) target = $region44
      $region43: #{tpu_custom_call.1} parent=5 // pred_region
        %s325 = ssub.s32 %s27, 1
        %s326 = sand.u32 %s40, 1
        %s327 = scalar_lea.sflag [#allocation3], %s326
        %s328 = sand.u32 %s40, 1
        %s329 = scalar_lea.vmem [#allocation2], %s328
        // Predicated region
        $region45: #{tpu_custom_call.1} parent=43 // pred_check
          %p330 = pneg %p53
        $region46: #{tpu_custom_call.1} parent=43 // pred_check_branch
          %332 = sbr.rel (%p330) target = $region48
        $region47: #{tpu_custom_call.1} parent=43 // pred_region
          %333 = dma.done %s327, 16
        $region48: #{tpu_custom_call.1} parent=43 // pred_fallthru
          _
        %s334 = sand.u32 %s32, 1
        %s335 = scalar_lea.sflag [#allocation6], %s334
        %s336 = sand.u32 %s66, 1
        %s337 = smul.addr %s336, 8
        %s338 = scalar_lea.vmem [#allocation5], %s337
        // Predicated region
        $region49: #{tpu_custom_call.1} parent=43 // pred_check
          %p339 = pneg %p79
        $region50: #{tpu_custom_call.1} parent=43 // pred_check_branch
          %341 = sbr.rel (%p339) target = $region52
        $region51: #{tpu_custom_call.1} parent=43 // pred_region
          %342 = dma.done %s335, 128
        $region52: #{tpu_custom_call.1} parent=43 // pred_fallthru
          _
        %s343 = sand.u32 %s32, 1
        %s344 = scalar_lea.sflag [#allocation6], %s343
        %s345 = sand.u32 %s92, 1
        %s346 = smul.addr %s345, 8
        %s347 = scalar_lea.vmem [#allocation7], %s346
        // Predicated region
        $region53: #{tpu_custom_call.1} parent=43 // pred_check
          %p348 = pneg %p105
        $region54: #{tpu_custom_call.1} parent=43 // pred_check_branch
          %350 = sbr.rel (%p348) target = $region56
        $region55: #{tpu_custom_call.1} parent=43 // pred_region
          %351 = dma.done %s344, 128
        $region56: #{tpu_custom_call.1} parent=43 // pred_fallthru
          _
        // Predicated region
        $region57: #{tpu_custom_call.1} parent=43 // pred_check
          %p352 = pneg %p152
        $region58: #{tpu_custom_call.1} parent=43 // pred_check_branch
          %354 = sbr.rel (%p352) target = $region60
        $region59: #{tpu_custom_call.1} parent=43 // pred_region
          %355 = dma.done [#allocation9], 512
        $region60: #{tpu_custom_call.1} parent=43 // pred_fallthru
          _
        %s356 = sand.u32 %s40, 1
        %s357 = scalar_lea.sflag [#allocation3], %s356
        %s358 = sand.u32 %s40, 1
        %s359 = scalar_lea.vmem [#allocation2], %s358
        %p360 = pneg %p53
        %p361 = pneg %p50
        %s362 = sand.u32 %s32, 1
        %s363 = scalar_lea.sflag [#allocation6], %s362
        %s364 = sand.u32 %s66, 1
        %s365 = smul.addr %s364, 8
        %s366 = scalar_lea.vmem [#allocation5], %s365
        %p367 = pneg %p79
        %p368 = pneg %p76
        %s369 = sand.u32 %s32, 1
        %s370 = scalar_lea.sflag [#allocation6], %s369
        %s371 = sand.u32 %s92, 1
        %s372 = smul.addr %s371, 8
        %s373 = scalar_lea.vmem [#allocation7], %s372
        %p374 = pneg %p105
        %p375 = pneg %p102
        %p376 = scmp.lt.s32.totalorder %s32, 1
        %s377 = scalar_select %p376, %s32, 1
        %s378 = scalar_lea.vmem %s3, %s377
        %p379 = pneg %p131
        %p380 = pneg %p128
        %p381 = pneg %p152
        %p382 = pneg %p149
        %p383 = pneg %p173
        %p384 = pneg %p170
        %p385 = pneg %p199
        %p386 = pneg %p196
        %s387 = sand.u32 %s186, 1
        %s388 = scalar_lea.sflag [#allocation4], %s387
        %s389 = sand.u32 %s186, 1
        %s390 = scalar_lea.vmem [#allocation10], %s389
        %p391 = pneg %p225
        %p392 = pneg %p222
        %s393 = sand.u32 %s212, 1
        %s394 = scalar_lea.sflag [#allocation12], %s393
        %s395 = sand.u32 %s212, 1
        %s396 = scalar_lea.vmem [#allocation11], %s395
        %p397 = scmp.lt.s32.totalorder %s32, 1
        %s398 = scalar_select %p397, %s32, 1
        %s399 = scalar_lea.vmem %s3, %s398
        %v400 = vld [vmem:[%s329] sm:$0x1]
        %v401 = vld [vmem:[#allocation8] sm:$0xff]
        %v402 = vld [vmem:[#allocation8 + $0x8] sm:$0xff]
        %v403 = vld [vmem:[#allocation8 + $0x10] sm:$0xff]
        %v404 = vld [vmem:[#allocation8 + $0x18] sm:$0xff]
        %vm405 = vcmask 261120
        %v407 = vsel %vm405, %v400, 0
        %v410 = vsel %vm405, %v401, 0
        %v413 = vsel %vm405, %v402, 0
        %v416 = vsel %vm405, %v403, 0
        %v419 = vsel %vm405, %v404, 0
        %421 = vmatprep.subr.mxu0 0.0
        %422 = vmatpush1.xpose.msra.mxu0 %v410
        %423 = vmatprep.subr.mxu0 0.0
        %424 = vmatpush1.xpose.msra.mxu0 %v413
        %425 = vmatprep.subr.mxu0 0.0
        %426 = vmatpush1.xpose.msra.mxu0 %v416
        %427 = vmatprep.subr.mxu0 0.0
        %428 = vmatpush1.xpose.msra.mxu0 %v419
        %429 = vmatprep.subr.mxu0 0.0
        %430 = vmatpush1.xpose.msra.mxu0 0.0
        %431 = vmatprep.subr.mxu0 0.0
        %432 = vmatpush1.xpose.msra.mxu0 0.0
        %433 = vmatprep.subr.mxu0 0.0
        %434 = vmatpush1.xpose.msra.mxu0 0.0
        %435 = vmatprep.subr.mxu0 0.0
        %436 = vmatpush1.xpose.msra.mxu0 0.0
        %437 = vmatprep.subr.mxu0 0.0
        %438 = vmatpush1.xpose.msra.mxu0 0.0
        %439 = vmatprep.subr.mxu0 0.0
        %440 = vmatpush1.xpose.msra.mxu0 0.0
        %441 = vmatprep.subr.mxu0 0.0
        %442 = vmatpush1.xpose.msra.mxu0 0.0
        %443 = vmatprep.subr.mxu0 0.0
        %444 = vmatpush1.xpose.msra.mxu0 0.0
        %445 = vmatprep.subr.mxu0 0.0
        %446 = vmatpush1.xpose.msra.mxu0 0.0
        %447 = vmatprep.subr.mxu0 0.0
        %448 = vmatpush1.xpose.msra.mxu0 0.0
        %449 = vmatprep.subr.mxu0 0.0
        %450 = vmatpush1.xpose.msra.mxu0 0.0
        %451 = vmatprep.subr.mxu0 0.0
        %452 = vmatpush1.xpose.msra.mxu0 0.0
        %453 = vmatprep.subr.mxu0 0.0
        %454 = vmatpush1.xpose.msra.mxu0 0.0
        %455 = vmatprep.subr.mxu0 0.0
        %456 = vmatpush1.xpose.msra.mxu0 0.0
        %457 = vmatprep.subr.mxu0 0.0
        %458 = vmatpush1.xpose.msra.mxu0 0.0
        %459 = vmatprep.subr.mxu0 0.0
        %460 = vmatpush1.xpose.msra.mxu0 0.0
        %461 = vmatprep.subr.mxu0 0.0
        %462 = vmatpush1.xpose.msra.mxu0 0.0
        %463 = vmatprep.subr.mxu0 0.0
        %464 = vmatpush1.xpose.msra.mxu0 0.0
        %465 = vmatprep.subr.mxu0 0.0
        %466 = vmatpush1.xpose.msra.mxu0 0.0
        %467 = vmatprep.subr.mxu0 0.0
        %468 = vmatpush1.xpose.msra.mxu0 0.0
        %469 = vmatprep.subr.mxu0 0.0
        %470 = vmatpush1.xpose.msra.mxu0 0.0
        %471 = vmatprep.subr.mxu0 0.0
        %472 = vmatpush1.xpose.msra.mxu0 0.0
        %473 = vmatprep.subr.mxu0 0.0
        %474 = vmatpush1.xpose.msra.mxu0 0.0
        %475 = vmatprep.subr.mxu0 0.0
        %476 = vmatpush1.xpose.msra.mxu0 0.0
        %477 = vmatprep.subr.mxu0 0.0
        %478 = vmatpush1.xpose.msra.mxu0 0.0
        %479 = vmatprep.subr.mxu0 0.0
        %480 = vmatpush1.xpose.msra.mxu0 0.0
        %481 = vmatprep.subr.mxu0 0.0
        %482 = vmatpush1.xpose.msra.mxu0 0.0
        %483 = vmatprep.subr.mxu0 0.0
        %484 = vmatpush1.xpose.msra.mxu0 0.0
        %485 = vmatprep.mubr.f32.mxu0 0.0
        %486 = vmatmul.mubr.f32.gmra.mrb[0].mxu0 %v407
        %v487 = vpop.f32.mrb[0].mxu0
        %v488 = vadd.f32 0.0, %v487
        %v489 = vpop.f32.mrb[0].mxu0
        %490 = vdwg.mxu0
        %v491 = vld [vmem:[%s338] sm:$0xff]
        %v492 = vlaneseq
        %v493 = vshrl.u32 %v492, 7
        %v494 = vsub.s32 0, %v493
        %v495 = vrot.slane %v488, %v494
        %v496 = vadd.f32 %v495, %v491
        %v497 = vtanh.pop %v496
        %v498 = vld [vmem:[%s5] sm:$0x1]
        %v500 = vsel %vm405, %v498, 0
        %v503 = vsel %vm405, %v497, 0
        %505 = vmatprep.subr.mxu0 0.0
        %506 = vmatpush1.xpose.msra.mxu0 %v503
        %507 = vmatprep.subr.mxu0 0.0
        %508 = vmatpush1.xpose.msra.mxu0 0.0
        %509 = vmatprep.subr.mxu0 0.0
        %510 = vmatpush1.xpose.msra.mxu0 0.0
        %511 = vmatprep.subr.mxu0 0.0
        %512 = vmatpush1.xpose.msra.mxu0 0.0
        %513 = vmatprep.subr.mxu0 0.0
        %514 = vmatpush1.xpose.msra.mxu0 0.0
        %515 = vmatprep.subr.mxu0 0.0
        %516 = vmatpush1.xpose.msra.mxu0 0.0
        %517 = vmatprep.subr.mxu0 0.0
        %518 = vmatpush1.xpose.msra.mxu0 0.0
        %519 = vmatprep.subr.mxu0 0.0
        %520 = vmatpush1.xpose.msra.mxu0 0.0
        %521 = vmatprep.subr.mxu0 0.0
        %522 = vmatpush1.xpose.msra.mxu0 0.0
        %523 = vmatprep.subr.mxu0 0.0
        %524 = vmatpush1.xpose.msra.mxu0 0.0
        %525 = vmatprep.subr.mxu0 0.0
        %526 = vmatpush1.xpose.msra.mxu0 0.0
        %527 = vmatprep.subr.mxu0 0.0
        %528 = vmatpush1.xpose.msra.mxu0 0.0
        %529 = vmatprep.subr.mxu0 0.0
        %530 = vmatpush1.xpose.msra.mxu0 0.0
        %531 = vmatprep.subr.mxu0 0.0
        %532 = vmatpush1.xpose.msra.mxu0 0.0
        %533 = vmatprep.subr.mxu0 0.0
        %534 = vmatpush1.xpose.msra.mxu0 0.0
        %535 = vmatprep.subr.mxu0 0.0
        %536 = vmatpush1.xpose.msra.mxu0 0.0
        %537 = vmatprep.subr.mxu0 0.0
        %538 = vmatpush1.xpose.msra.mxu0 0.0
        %539 = vmatprep.subr.mxu0 0.0
        %540 = vmatpush1.xpose.msra.mxu0 0.0
        %541 = vmatprep.subr.mxu0 0.0
        %542 = vmatpush1.xpose.msra.mxu0 0.0
        %543 = vmatprep.subr.mxu0 0.0
        %544 = vmatpush1.xpose.msra.mxu0 0.0
        %545 = vmatprep.subr.mxu0 0.0
        %546 = vmatpush1.xpose.msra.mxu0 0.0
        %547 = vmatprep.subr.mxu0 0.0
        %548 = vmatpush1.xpose.msra.mxu0 0.0
        %549 = vmatprep.subr.mxu0 0.0
        %550 = vmatpush1.xpose.msra.mxu0 0.0
        %551 = vmatprep.subr.mxu0 0.0
        %552 = vmatpush1.xpose.msra.mxu0 0.0
        %553 = vmatprep.subr.mxu0 0.0
        %554 = vmatpush1.xpose.msra.mxu0 0.0
        %555 = vmatprep.subr.mxu0 0.0
        %556 = vmatpush1.xpose.msra.mxu0 0.0
        %557 = vmatprep.subr.mxu0 0.0
        %558 = vmatpush1.xpose.msra.mxu0 0.0
        %559 = vmatprep.subr.mxu0 0.0
        %560 = vmatpush1.xpose.msra.mxu0 0.0
        %561 = vmatprep.subr.mxu0 0.0
        %562 = vmatpush1.xpose.msra.mxu0 0.0
        %563 = vmatprep.subr.mxu0 0.0
        %564 = vmatpush1.xpose.msra.mxu0 0.0
        %565 = vmatprep.subr.mxu0 0.0
        %566 = vmatpush1.xpose.msra.mxu0 0.0
        %567 = vmatprep.subr.mxu0 0.0
        %568 = vmatpush1.xpose.msra.mxu0 0.0
        %569 = vmatprep.mubr.f32.mxu0 0.0
        %570 = vmatmul.mubr.f32.gmra.mrb[0].mxu0 %v500
        %v571 = vpop.f32.mrb[0].mxu0
        %v572 = vadd.f32 0.0, %v571
        %v573 = vpop.f32.mrb[0].mxu0
        %574 = vdwg.mxu0
        %v575 = vld [vmem:[%s399] sm:$0x1]
        %vm576 = vcmp.eq.s32.totalorder %v575, 0
        %v577 = vsel %vm576, -inf, %v572
        %vm578 = vcmask 57344
        %v579 = vsel %vm578, %v577, -inf
        %580 = vmax.xlane.f32.xlu0 %v579
        %v581 = vpop.xlane.xlu0 %580
        %v582 = vsub.f32 %v577, %v581
        %v583 = vmul.f32 %v582, 1.442695
        %v584 = vpow.pop %v583
        %v585 = vsel %vm578, %v584, 0.0
        %586 = vadd.xlane.f32.xlu0 %v585
        %v587 = vpop.xlane.xlu0 %586
        %v588 = vrcp.pop %v587
        %v589 = vmul.f32 %v584, %v588
        %590 = vst.msk [vmem:[%s396] sm:$0x1] %vm578, %v589
        %v591 = vld [vmem:[%s347] sm:$0xff]
        %vm592 = vcmask 64512
        %v594 = vsel %vm592, %v589, 0
        %596 = vmatprep.subr.mxu0 0.0
        %597 = vmatpush1.msra.mxu0 %v591
        %598 = vmatprep.subr.mxu0 0.0
        %599 = vmatpush1.msra.mxu0 0.0
        %600 = vmatprep.subr.mxu0 0.0
        %601 = vmatpush1.msra.mxu0 0.0
        %602 = vmatprep.subr.mxu0 0.0
        %603 = vmatpush1.msra.mxu0 0.0
        %604 = vmatprep.subr.mxu0 0.0
        %605 = vmatpush1.msra.mxu0 0.0
        %606 = vmatprep.subr.mxu0 0.0
        %607 = vmatpush1.msra.mxu0 0.0
        %608 = vmatprep.subr.mxu0 0.0
        %609 = vmatpush1.msra.mxu0 0.0
        %610 = vmatprep.subr.mxu0 0.0
        %611 = vmatpush1.msra.mxu0 0.0
        %612 = vmatprep.subr.mxu0 0.0
        %613 = vmatpush1.msra.mxu0 0.0
        %614 = vmatprep.subr.mxu0 0.0
        %615 = vmatpush1.msra.mxu0 0.0
        %616 = vmatprep.subr.mxu0 0.0
        %617 = vmatpush1.msra.mxu0 0.0
        %618 = vmatprep.subr.mxu0 0.0
        %619 = vmatpush1.msra.mxu0 0.0
        %620 = vmatprep.subr.mxu0 0.0
        %621 = vmatpush1.msra.mxu0 0.0
        %622 = vmatprep.subr.mxu0 0.0
        %623 = vmatpush1.msra.mxu0 0.0
        %624 = vmatprep.subr.mxu0 0.0
        %625 = vmatpush1.msra.mxu0 0.0
        %626 = vmatprep.subr.mxu0 0.0
        %627 = vmatpush1.msra.mxu0 0.0
        %628 = vmatprep.subr.mxu0 0.0
        %629 = vmatpush1.msra.mxu0 0.0
        %630 = vmatprep.subr.mxu0 0.0
        %631 = vmatpush1.msra.mxu0 0.0
        %632 = vmatprep.subr.mxu0 0.0
        %633 = vmatpush1.msra.mxu0 0.0
        %634 = vmatprep.subr.mxu0 0.0
        %635 = vmatpush1.msra.mxu0 0.0
        %636 = vmatprep.subr.mxu0 0.0
        %637 = vmatpush1.msra.mxu0 0.0
        %638 = vmatprep.subr.mxu0 0.0
        %639 = vmatpush1.msra.mxu0 0.0
        %640 = vmatprep.subr.mxu0 0.0
        %641 = vmatpush1.msra.mxu0 0.0
        %642 = vmatprep.subr.mxu0 0.0
        %643 = vmatpush1.msra.mxu0 0.0
        %644 = vmatprep.subr.mxu0 0.0
        %645 = vmatpush1.msra.mxu0 0.0
        %646 = vmatprep.subr.mxu0 0.0
        %647 = vmatpush1.msra.mxu0 0.0
        %648 = vmatprep.subr.mxu0 0.0
        %649 = vmatpush1.msra.mxu0 0.0
        %650 = vmatprep.subr.mxu0 0.0
        %651 = vmatpush1.msra.mxu0 0.0
        %652 = vmatprep.subr.mxu0 0.0
        %653 = vmatpush1.msra.mxu0 0.0
        %654 = vmatprep.subr.mxu0 0.0
        %655 = vmatpush1.msra.mxu0 0.0
        %656 = vmatprep.subr.mxu0 0.0
        %657 = vmatpush1.msra.mxu0 0.0
        %658 = vmatprep.subr.mxu0 0.0
        %659 = vmatpush1.msra.mxu0 0.0
        %660 = vmatprep.mubr.f32.mxu0 0.0
        %661 = vmatmul.mubr.f32.gmra.mrb[0].mxu0 %v594
        %v662 = vpop.f32.mrb[0].mxu0
        %v663 = vadd.f32 0.0, %v662
        %v664 = vpop.f32.mrb[0].mxu0
        %665 = vdwg.mxu0
        %vm666 = vcmask 516096
        %667 = vst.msk [vmem:[%s390] sm:$0x1] %vm666, %v663
        %s668 = sand.u32 %s186, 1
        %s669 = scalar_lea.sflag [#allocation4], %s668
        %s670 = sand.u32 %s186, 1
        %s671 = scalar_lea.vmem [#allocation10], %s670
        %s672 = sand.u32 %s212, 1
        %s673 = scalar_lea.sflag [#allocation12], %s672
        %s674 = sand.u32 %s212, 1
        %s675 = scalar_lea.vmem [#allocation11], %s674
        // Predicated region
        $region61: #{tpu_custom_call.1} parent=43 // pred_check
          %p676 = pneg %p196
        $region62: #{tpu_custom_call.1} parent=43 // pred_check_branch
          %678 = sbr.rel (%p676) target = $region64
        $region63: #{tpu_custom_call.1} parent=43 // pred_region
          %s680 = ssub.s32 16, 16
          %681 = vsyncadd %s669, %s680
          %s682 = smul.addr %s32, 16
          %s683 = scalar_lea.hbm %s6, %s682
          %s685 = sshll.u32 %s671, 4
          %s686 = int_to_ptr.vmem [resolvable:$true] %s685
          %688 = dma.vmem_to_hbm [thread:$0]  %s686, 16, %s683, %s669
        $region64: #{tpu_custom_call.1} parent=43 // pred_fallthru
          _
        // Predicated region
        $region65: #{tpu_custom_call.1} parent=43 // pred_check
          %p689 = pneg %p222
        $region66: #{tpu_custom_call.1} parent=43 // pred_check_branch
          %691 = sbr.rel (%p689) target = $region68
        $region67: #{tpu_custom_call.1} parent=43 // pred_region
          %s693 = ssub.s32 16, 16
          %694 = vsyncadd %s673, %s693
          %s695 = smul.addr %s32, 16
          %s696 = scalar_lea.hbm %s7, %s695
          %s698 = sshll.u32 %s675, 4
          %s699 = int_to_ptr.vmem [resolvable:$true] %s698
          %701 = dma.vmem_to_hbm [thread:$0]  %s699, 16, %s696, %s673
        $region68: #{tpu_custom_call.1} parent=43 // pred_fallthru
          _
      $region44: #{tpu_custom_call.1} parent=5 // pred_fallthru
        _
      %p702 = scmp.le.s32.totalorder 2, %s27
      // Predicated region
      $region69: #{tpu_custom_call.1} parent=5 // pred_check
        %p703 = pneg %p702
      $region70: #{tpu_custom_call.1} parent=5 // pred_check_branch
        %705 = sbr.rel (%p703) target = $region72
      $region71: #{tpu_custom_call.1} parent=5 // pred_region
        %s706 = ssub.s32 %s27, 2
        // Predicated region
        $region73: #{tpu_custom_call.1} parent=71 // pred_check
          %p707 = pneg %p202
        $region74: #{tpu_custom_call.1} parent=71 // pred_check_branch
          %709 = sbr.rel (%p707) target = $region76
        $region75: #{tpu_custom_call.1} parent=71 // pred_region
          %s710 = sand.u32 %s187, 1
          %s711 = scalar_lea.sflag [#allocation4], %s710
          %s712 = sand.u32 %s187, 1
          %s713 = scalar_lea.vmem [#allocation10], %s712
          %714 = dma.done %s711, 16
        $region76: #{tpu_custom_call.1} parent=71 // pred_fallthru
          _
        // Predicated region
        $region77: #{tpu_custom_call.1} parent=71 // pred_check
          %p715 = pneg %p228
        $region78: #{tpu_custom_call.1} parent=71 // pred_check_branch
          %717 = sbr.rel (%p715) target = $region80
        $region79: #{tpu_custom_call.1} parent=71 // pred_region
          %s718 = sand.u32 %s213, 1
          %s719 = scalar_lea.sflag [#allocation12], %s718
          %s720 = sand.u32 %s213, 1
          %s721 = scalar_lea.vmem [#allocation11], %s720
          %722 = dma.done %s719, 16
        $region80: #{tpu_custom_call.1} parent=71 // pred_fallthru
          _
      $region72: #{tpu_custom_call.1} parent=5 // pred_fallthru
        _
    $region6: #{tpu_custom_call.1} parent=1 // loop_footer
      %s31 = sadd.s32 1, %s27
    $region7: #{tpu_custom_call.1} parent=1 // loop_footer_branch
      %26 = sbr.rel target = $region3
    $region8: #{tpu_custom_call.1} parent=1 // loop_exit
      _
    %723 = vsyncpa [#allocation3], 1
    %s724 = scalar_lea.sflag [#allocation3], 1
    %725 = vsyncpa %s724, 1
    %726 = vsyncpa [#allocation6], 1
    %s727 = scalar_lea.sflag [#allocation6], 1
    %728 = vsyncpa %s727, 1
    %729 = vsyncpa [#allocation9], 1
    %730 = vsyncpa [#allocation4], 1
    %s731 = scalar_lea.sflag [#allocation4], 1
    %732 = vsyncpa %s731, 1
    %733 = vsyncpa [#allocation12], 1
    %s734 = scalar_lea.sflag [#allocation12], 1
    %735 = vsyncpa %s734, 1

</llo_original>
